<compile_context>
chip_gen: v7x
topology: tpu7x:2x2x1
jax: 0.10.0
libtpu: 0.0.40
codegen_flags: <defaults>
</compile_context>

<pallas_src>
import jax
import jax.numpy as jnp
from jax import lax
from jax.experimental import pallas as pl
from jax.experimental.pallas import tpu as pltpu

_MAX_BLOCK_BYTES = 4 * 1024 * 1024  # per-block cap; 2 arrays x 2 bufs ~= 16 MiB peak


def _make_kernel(C, tile_r):
    def kernel(scale_ref, bias_ref, x_ref, o_ref):
        # scale_ref / bias_ref : (C,) f32 in SMEM (scalar prefetch)
        # x_ref / o_ref        : (tile_r, tile_hw) f32 in VMEM
        i = pl.program_id(0)
        rows = lax.broadcasted_iota(jnp.int32, (tile_r, 1), 0) + i * tile_r
        ch = rows % C  # global row r of the (N*C, H*W) view -> channel r % C
        s = jnp.full((tile_r, 1), scale_ref[0], dtype=x_ref.dtype)
        b = jnp.full((tile_r, 1), bias_ref[0], dtype=x_ref.dtype)
        for c in range(1, C):  # C is tiny (3); unrolled select chain
            s = jnp.where(ch == c, scale_ref[c], s)
            b = jnp.where(ch == c, bias_ref[c], b)
        o_ref[...] = x_ref[...] * s + b  # y = x*scale + bias (lane broadcast)

    return kernel


def preprocess(x, mean, std):
    """x: (N, C, H, W) float32; mean/std: (C,) float32 -> (N, C, H, W) float32."""
    N, C, H, W = x.shape
    R, HW = N * C, H * W
    itemsize = x.dtype.itemsize

    # Fold normalization into one multiply-add:  y = x*scale + bias
    scale = (1.0 / (255.0 * std)).astype(jnp.float32)  # (C,)
    bias = (-mean / std).astype(jnp.float32)            # (C,)

    x2 = x.reshape(R, HW)  # lane-dense view; free (contiguous) reshape

    # ---- lane (last-dim) tile: prefer the full row when it fits the budget ----
    if HW <= 128:
        tile_hw = HW                                   # full-extent block (legal)
    elif HW % 128 == 0 and HW * 8 * itemsize <= _MAX_BLOCK_BYTES:
        tile_hw = HW                                   # one contiguous DMA per block
    else:
        lanes_budget = max(128, (_MAX_BLOCK_BYTES // (8 * itemsize)) // 128 * 128)
        tile_hw = min(lanes_budget, (HW // 128) * 128)  # 128-multiple; ragged last block

    # ---- row tile: multiple of 8, sized from the remaining byte budget ----
    rows_budget = max(8, (_MAX_BLOCK_BYTES // (tile_hw * itemsize)) // 8 * 8)
    tile_r = min(rows_budget, ((R + 7) // 8) * 8)

    grid_r = pl.cdiv(R, tile_r)
    grid_hw = pl.cdiv(HW, tile_hw)

    # Keep >= 2 parallel grid steps so v7x megacore has work to split.
    if grid_r * grid_hw == 1:
        if tile_r > 8 and R > 8:
            tile_r = max(8, ((tile_r // 2) + 7) // 8 * 8)
            grid_r = pl.cdiv(R, tile_r)
        elif tile_hw >= 256 and tile_hw % 256 == 0:
            tile_hw //= 2
            grid_hw = pl.cdiv(HW, tile_hw)

    block_bytes = tile_r * tile_hw * itemsize
    # double-buffered in + out blocks + slack; always <= ~20 MiB, safe on v5e/v6e/v7x
    vmem_limit = max(16 * 1024 * 1024, 4 * block_bytes + 4 * 1024 * 1024)

    kernel = _make_kernel(C, tile_r)

    out2 = pl.pallas_call(
        kernel,
        out_shape=jax.ShapeDtypeStruct((R, HW), x.dtype),
        grid_spec=pltpu.PrefetchScalarGridSpec(
            num_scalar_prefetch=2,  # scale, bias -> SMEM
            grid=(grid_r, grid_hw),
            in_specs=[
                pl.BlockSpec((tile_r, tile_hw), lambda i, j, s, b: (i, j)),
            ],
            out_specs=pl.BlockSpec((tile_r, tile_hw), lambda i, j, s, b: (i, j)),
        ),
        compiler_params=pltpu.CompilerParams(
            dimension_semantics=("parallel", "parallel"),
            vmem_limit_bytes=vmem_limit,
        ),
    )(scale, bias, x2)

    return out2.reshape(N, C, H, W)


if __name__ == "__main__":
    # Deterministic parameters (from the module's __init__; C is fixed at 3)
    mean = jnp.array([0.485, 0.456, 0.406], dtype=jnp.float32)
    std = jnp.array([0.229, 0.224, 0.225], dtype=jnp.float32)

    # Small deterministic input: batch=2, channels=3 (RGB), 16x16 spatial
    key = jax.random.PRNGKey(0)
    x = jax.random.uniform(key, (2, 3, 16, 16), dtype=jnp.float32) * 255.0

    out = jax.block_until_ready(preprocess(x, mean, std))

    # Reference check in plain JAX
    ref = ((x / 255.0) - mean.reshape(1, 3, 1, 1)) / std.reshape(1, 3, 1, 1)
    assert out.shape == x.shape and out.dtype == x.dtype
    assert jnp.allclose(out, ref, atol=1e-5, rtol=1e-5)

    print("KERNEL_OK")
</pallas_src>

<mosaic_0001>
module attributes {stable_mosaic.version = 11 : i64} {
  func.func @kernel(%arg0: i32, %arg1: i32, %arg2: memref<3xf32, #tpu.memory_space<smem>>, %arg3: memref<3xf32, #tpu.memory_space<smem>>, %arg4: memref<8x128xf32, #tpu.memory_space<vmem>>, %arg5: memref<8x128xf32, #tpu.memory_space<vmem>>) attributes {dimension_semantics = [#tpu.dimension_semantics<parallel>, #tpu.dimension_semantics<parallel>], iteration_bounds = array<i64: 1, 2>, scalar_prefetch = 2 : i64, scratch_operands = 0 : i64, tpu.core_type = #tpu.core_type<tc>, window_params = [{transform_indices = @transform_0, window_bounds = array<i64: 8, 128>}, {transform_indices = @transform_1, window_bounds = array<i64: 8, 128>}]} {
    %0 = tpu.iota {dimensions = array<i32: 0>} : vector<8x1xi32>
    %c8_i32 = arith.constant 8 : i32
    %1 = arith.muli %arg0, %c8_i32 : i32
    %2 = vector.broadcast %1 : i32 to vector<8x1xi32>
    %3 = arith.addi %0, %2 : vector<8x1xi32>
    %c3_i32 = arith.constant 3 : i32
    %c0_i32 = arith.constant 0 : i32
    %4 = arith.cmpi eq, %c3_i32, %c0_i32 : i32
    %c1_i32 = arith.constant 1 : i32
    %5 = arith.select %4, %c1_i32, %c3_i32 : i32
    %6 = vector.broadcast %5 : i32 to vector<8x1xi32>
    %7 = arith.remsi %3, %6 : vector<8x1xi32>
    %c0_i32_0 = arith.constant 0 : i32
    %8 = vector.broadcast %c0_i32_0 : i32 to vector<8x1xi32>
    %9 = arith.cmpi ne, %7, %8 : vector<8x1xi32>
    %c0_i32_1 = arith.constant 0 : i32
    %10 = vector.broadcast %c0_i32_1 : i32 to vector<8x1xi32>
    %11 = arith.cmpi slt, %7, %10 : vector<8x1xi32>
    %c0_i32_2 = arith.constant 0 : i32
    %12 = arith.cmpi slt, %5, %c0_i32_2 : i32
    %13 = vector.broadcast %12 : i1 to vector<8x1xi1>
    %14 = vector.broadcast %13 : vector<8x1xi1> to vector<8x1xi1>
    %15 = arith.xori %11, %14 : vector<8x1xi1>
    %16 = arith.andi %15, %9 : vector<8x1xi1>
    %17 = vector.broadcast %5 : i32 to vector<8x1xi32>
    %18 = arith.addi %7, %17 : vector<8x1xi32>
    %19 = arith.select %16, %18, %7 : vector<8x1xi1>, vector<8x1xi32>
    %c0 = arith.constant 0 : index
    %20 = memref.load %arg2[%c0] : memref<3xf32, #tpu.memory_space<smem>>
    %21 = vector.broadcast %20 : f32 to vector<8x1xf32>
    %c0_3 = arith.constant 0 : index
    %22 = memref.load %arg3[%c0_3] : memref<3xf32, #tpu.memory_space<smem>>
    %23 = vector.broadcast %22 : f32 to vector<8x1xf32>
    %c1_i32_4 = arith.constant 1 : i32
    %24 = vector.broadcast %c1_i32_4 : i32 to vector<8x1xi32>
    %25 = arith.cmpi eq, %19, %24 : vector<8x1xi32>
    %c1 = arith.constant 1 : index
    %26 = memref.load %arg2[%c1] : memref<3xf32, #tpu.memory_space<smem>>
    %27 = vector.broadcast %26 : f32 to vector<8x1xf32>
    %28 = arith.select %25, %27, %21 : vector<8x1xi1>, vector<8x1xf32>
    %c1_i32_5 = arith.constant 1 : i32
    %29 = vector.broadcast %c1_i32_5 : i32 to vector<8x1xi32>
    %30 = arith.cmpi eq, %19, %29 : vector<8x1xi32>
    %c1_6 = arith.constant 1 : index
    %31 = memref.load %arg3[%c1_6] : memref<3xf32, #tpu.memory_space<smem>>
    %32 = vector.broadcast %31 : f32 to vector<8x1xf32>
    %33 = arith.select %30, %32, %23 : vector<8x1xi1>, vector<8x1xf32>
    %c2_i32 = arith.constant 2 : i32
    %34 = vector.broadcast %c2_i32 : i32 to vector<8x1xi32>
    %35 = arith.cmpi eq, %19, %34 : vector<8x1xi32>
    %c2 = arith.constant 2 : index
    %36 = memref.load %arg2[%c2] : memref<3xf32, #tpu.memory_space<smem>>
    %37 = vector.broadcast %36 : f32 to vector<8x1xf32>
    %38 = arith.select %35, %37, %28 : vector<8x1xi1>, vector<8x1xf32>
    %c2_i32_7 = arith.constant 2 : i32
    %39 = vector.broadcast %c2_i32_7 : i32 to vector<8x1xi32>
    %40 = arith.cmpi eq, %19, %39 : vector<8x1xi32>
    %c2_8 = arith.constant 2 : index
    %41 = memref.load %arg3[%c2_8] : memref<3xf32, #tpu.memory_space<smem>>
    %42 = vector.broadcast %41 : f32 to vector<8x1xf32>
    %43 = arith.select %40, %42, %33 : vector<8x1xi1>, vector<8x1xf32>
    %c0_9 = arith.constant 0 : index
    %c0_10 = arith.constant 0 : index
    %44 = vector.load %arg4[%c0_9, %c0_10] : memref<8x128xf32, #tpu.memory_space<vmem>>, vector<8x128xf32>
    %45 = vector.broadcast %38 : vector<8x1xf32> to vector<8x128xf32>
    %46 = arith.mulf %44, %45 : vector<8x128xf32>
    %47 = vector.broadcast %43 : vector<8x1xf32> to vector<8x128xf32>
    %48 = arith.addf %46, %47 : vector<8x128xf32>
    %c0_11 = arith.constant 0 : index
    %c0_12 = arith.constant 0 : index
    %49 = vector.load %arg5[%c0_11, %c0_12] : memref<8x128xf32, #tpu.memory_space<vmem>>, vector<8x128xf32>
    tpu.vector_store %arg5[%c0_11, %c0_12], %48 {strides = array<i32>} : memref<8x128xf32, #tpu.memory_space<vmem>>, vector<8x128xf32>,
    return
  }
  func.func @transform_0(%arg0: i32, %arg1: i32, %arg2: memref<3xf32, #tpu.memory_space<smem>>, %arg3: memref<3xf32, #tpu.memory_space<smem>>) -> (i32, i32) {
    %c0_i32 = arith.constant 0 : i32
    return %arg0, %arg1 : i32, i32
  }
  func.func @transform_1(%arg0: i32, %arg1: i32, %arg2: memref<3xf32, #tpu.memory_space<smem>>, %arg3: memref<3xf32, #tpu.memory_space<smem>>) -> (i32, i32) {
    %c0_i32 = arith.constant 0 : i32
    return %arg0, %arg1 : i32, i32
  }
}

</mosaic_0001>

<llo_original>
// kernel: tpu_custom_call.1
$region0: #{tpu_custom_call.1}
  #allocation0 [shape = 'u32[]', space=smem, size = 0x4, offset = 0x4, fixed_abs, tag = 'smem constant byte address 0x4 - core index']
  #allocation1 [shape = 'u32[144,128]{1,0:T(1,128)}', space=vmem, size = 0x12000, scoped, tag = 'internal scratch']
  #allocation2 [shape = 's32[1]{0}', space=sflag, size = 0x4, scoped, tag = 'scoped memory for tpu_custom_call.1']
  #allocation3 [shape = 'u8[512]{0}', space=smem, size = 0x200, scoped, tag = 'prefetched SMEM operand 0']
  #allocation4 [shape = 'u8[512]{0}', space=smem, size = 0x200, scoped, tag = 'prefetched SMEM operand 1']
  %s0 = inlined_call_operand.hbm [shape: f32[3], index: 0, kind: input, shape index: {}]
  %s1 = inlined_call_operand.vmem [shape: f32[3], index: 1, kind: input, shape index: {}]
  %s2 = inlined_call_operand.hbm [shape: f32[6,256], index: 2, kind: input, shape index: {}]
  %s3 = inlined_call_operand.hbm [shape: f32[6,256], index: 3, kind: output, shape index: {}]
  %s4 = sld [smem:[#allocation0]]
  $region41: #{tpu_custom_call.1} parent=0
    _
  %s6 = ssub.s32 1, %s4
  %s7 = scalar_select 0, %s6, %s4
  %9 = dma.hbm_to_smem %s0, 16, [#allocation3], [#allocation2]
  %s10 = sshll.u32 %s1, 4
  %s11 = int_to_ptr.vmem [resolvable:$true] %s10
  %13 = dma.vmem_to_smem %s11, 16, [#allocation4], [#allocation2]
  %14 = dma.done [#allocation2], 32
  %15 = sfence
  $region1: #{tpu_custom_call.1} parent=0
    #allocation5 [shape = 'u8[8192]{0}', space=vmem, size = 0x2000, scoped, tag = 'input window, operand 2']
    #allocation6 [shape = 's32[2]{0}', space=sflag, size = 0x8, scoped, tag = 'scoped memory for tpu_custom_call.1']
    #allocation7 [shape = 's32[2]{0}', space=sflag, size = 0x8, scoped, tag = 'scoped memory for tpu_custom_call.1']
    #allocation8 [shape = 'u8[8192]{0}', space=vmem, size = 0x2000, scoped, tag = 'output window, operand 0']
    %16 = vsyncpa [#allocation6], 0
    %s17 = scalar_lea.sflag [#allocation6], 1
    %18 = vsyncpa %s17, 0
    %19 = vsyncpa [#allocation7], 0
    %s20 = scalar_lea.sflag [#allocation7], 1
    %21 = vsyncpa %s20, 0
    loop: start=0, step=1, limit=4
    $region2: #{tpu_custom_call.1} parent=1 // loop_pre_header
      _
    $region3: #{tpu_custom_call.1} parent=1 // loop_header
      %s23 = sphi 0, %s27
      %p24 = scmp.ge.s32.totalorder %s23, 4
      %s30 = sphi 0, %s42
      %s31 = sphi 0, %s38
      %s32 = sphi 0, %s30
      %s33 = sphi 0, %s31
      %s34 = sphi 0, %s32
      %s35 = sphi 0, %s33
      %s47 = sphi 0, %s49
      %s50 = sphi 0, %s47
      %s51 = sphi 0, %s50
      %s67 = sphi 0, %s51
      %s75 = sphi 0, %s77
      %s78 = sphi 0, %s75
      %s79 = sphi 0, %s78
      %s95 = sphi 0, %s79
    $region4: #{tpu_custom_call.1} parent=1 // loop_header_branch
      %26 = sbr.rel (%p24) target = $region8
    $region5: #{tpu_custom_call.1} parent=1 // loop_body
      %s28 = ssub.s32 %s23, 1
      %s29 = ssub.s32 %s23, 2
      %s36 = sadd.s32 1, %s31
      %p37 = scmp.ge.s32.totalorder %s36, 2
      %s38 = scalar_select %p37, 0, %s36
      %s39 = sadd.s32 1, %s30
      %s40 = scalar_select %p37, %s39, %s30
      %p41 = scmp.ge.s32.totalorder %s40, 1
      %s42 = scalar_select %p41, 0, %s40
      %s43 = ssub.s32 %s30, %s42
      %s44 = ssub.s32 %s31, %s38
      %s45 = sor.u32 %s43, %s44
      %p46 = scmp.eq.s32.totalorder %s45, 0
      %s48 = sadd.s32 %s47, 1
      %s49 = scalar_select %p46, %s47, %s48
      %p52 = pneg %p46
      %p53 = scmp.eq.s32.totalorder %s23, 1
      %p54 = por %p52, %p53
      %p55 = scmp.ne.s32.totalorder %s47, %s50
      %p56 = scmp.eq.s32.totalorder %s23, 0
      %p57 = por %p55, %p56
      %p58 = scmp.ne.s32.totalorder %s47, %s50
      %p59 = scmp.eq.s32.totalorder %s28, 1
      %p60 = por %p58, %p59
      %p61 = scmp.ne.s32.totalorder %s50, %s51
      %p62 = scmp.eq.s32.totalorder %s28, 0
      %p63 = por %p61, %p62
      %p64 = scmp.ne.s32.totalorder %s50, %s51
      %p65 = scmp.eq.s32.totalorder %s29, 1
      %p66 = por %p64, %p65
      %p68 = scmp.ne.s32.totalorder %s51, %s67
      %p69 = scmp.eq.s32.totalorder %s29, 0
      %p70 = por %p68, %p69
      %s71 = ssub.s32 %s30, %s42
      %s72 = ssub.s32 %s31, %s38
      %s73 = sor.u32 %s71, %s72
      %p74 = scmp.eq.s32.totalorder %s73, 0
      %s76 = sadd.s32 %s75, 1
      %s77 = scalar_select %p74, %s75, %s76
      %p80 = pneg %p74
      %p81 = scmp.eq.s32.totalorder %s23, 1
      %p82 = por %p80, %p81
      %p83 = scmp.ne.s32.totalorder %s75, %s78
      %p84 = scmp.eq.s32.totalorder %s23, 0
      %p85 = por %p83, %p84
      %p86 = scmp.ne.s32.totalorder %s75, %s78
      %p87 = scmp.eq.s32.totalorder %s28, 1
      %p88 = por %p86, %p87
      %p89 = scmp.ne.s32.totalorder %s78, %s79
      %p90 = scmp.eq.s32.totalorder %s28, 0
      %p91 = por %p89, %p90
      %p92 = scmp.ne.s32.totalorder %s78, %s79
      %p93 = scmp.eq.s32.totalorder %s29, 1
      %p94 = por %p92, %p93
      %p96 = scmp.ne.s32.totalorder %s79, %s95
      %p97 = scmp.eq.s32.totalorder %s29, 0
      %p98 = por %p96, %p97
      %p99 = scmp.le.s32.totalorder 1, %s23
      %p100 = scmp.lt.s32.totalorder %s23, 3
      %p101 = pnand %p99, %p100
      %p102 = pneg %p101
      // Predicated region
      $region9: #{tpu_custom_call.1} parent=5 // pred_check
        _
      $region10: #{tpu_custom_call.1} parent=5 // pred_check_branch
        %104 = sbr.rel (%p101) target = $region12
      $region11: #{tpu_custom_call.1} parent=5 // pred_region
        %s105 = ssub.s32 %s23, 1
      $region12: #{tpu_custom_call.1} parent=5 // pred_fallthru
        _
      %p106 = scmp.lt.s32.totalorder %s23, 2
      // Predicated region
      $region13: #{tpu_custom_call.1} parent=5 // pred_check
        %p107 = pneg %p106
      $region14: #{tpu_custom_call.1} parent=5 // pred_check_branch
        %109 = sbr.rel (%p107) target = $region16
      $region15: #{tpu_custom_call.1} parent=5 // pred_region
        // Predicated region
        $region17: #{tpu_custom_call.1} parent=15 // pred_check
          %p110 = pneg %p57
        $region18: #{tpu_custom_call.1} parent=15 // pred_check_branch
          %112 = sbr.rel (%p110) target = $region20
        $region19: #{tpu_custom_call.1} parent=15 // pred_region
          %s113 = sand.u32 %s47, 1
          %s114 = scalar_lea.sflag [#allocation6], %s113
          %s115 = sand.u32 %s47, 1
          %s116 = smul.addr %s115, 8
          %s117 = scalar_lea.vmem [#allocation5], %s116
          %s119 = ssub.s32 128, 128
          %120 = vsyncadd %s114, %s119
          %s121 = smul.addr %s30, 2
          %s122 = sadd.s32 %s31, %s121
          %s123 = smul.addr %s122, 128
          %s124 = scalar_lea.hbm %s2, %s123
          %s126 = sshll.u32 %s117, 4
          %s127 = int_to_ptr.vmem [resolvable:$true] %s126
          %129 = dma.hbm_to_vmem [thread:$0]  %s124, 128, %s127, %s114
        $region20: #{tpu_custom_call.1} parent=15 // pred_fallthru
          _
      $region16: #{tpu_custom_call.1} parent=5 // pred_fallthru
        _
      %p130 = scmp.le.s32.totalorder 1, %s23
      %p131 = scmp.lt.s32.totalorder %s23, 3
      %p132 = pnand %p130, %p131
      %p133 = pneg %p132
      // Predicated region
      $region21: #{tpu_custom_call.1} parent=5 // pred_check
        _
      $region22: #{tpu_custom_call.1} parent=5 // pred_check_branch
        %135 = sbr.rel (%p132) target = $region24
      $region23: #{tpu_custom_call.1} parent=5 // pred_region
        %s136 = ssub.s32 %s23, 1
        %s137 = sand.u32 %s50, 1
        %s138 = scalar_lea.sflag [#allocation6], %s137
        %s139 = sand.u32 %s50, 1
        %s140 = smul.addr %s139, 8
        %s141 = scalar_lea.vmem [#allocation5], %s140
        // Predicated region
        $region25: #{tpu_custom_call.1} parent=23 // pred_check
          %p142 = pneg %p63
        $region26: #{tpu_custom_call.1} parent=23 // pred_check_branch
          %144 = sbr.rel (%p142) target = $region28
        $region27: #{tpu_custom_call.1} parent=23 // pred_region
          %145 = dma.done %s138, 128
        $region28: #{tpu_custom_call.1} parent=23 // pred_fallthru
          _
        %s146 = sand.u32 %s50, 1
        %s147 = scalar_lea.sflag [#allocation6], %s146
        %s148 = sand.u32 %s50, 1
        %s149 = smul.addr %s148, 8
        %s150 = scalar_lea.vmem [#allocation5], %s149
        %p151 = pneg %p63
        %p152 = pneg %p60
        %p153 = pneg %p91
        %p154 = pneg %p88
        %s155 = sand.u32 %s78, 1
        %s156 = scalar_lea.sflag [#allocation7], %s155
        %s157 = sand.u32 %s78, 1
        %s158 = smul.addr %s157, 8
        %s159 = scalar_lea.vmem [#allocation8], %s158
        %v160 = vlaneseq
        %v161 = vshrl.u32 %v160, 7
        %s162 = smul.u32 %s32, 8
        %v163 = vstv %s162
        %v164 = vadd.s32 %v161, %v163
        %vm165 = vcmp.lt.s32.totalorder %v164, 0
        %v166 = vsub.s32 0, %v164
        %v167 = vsel %vm165, %v166, %v164
        %v168 = vmul.u32.u64.compose %v167, 2863311531
        %v169 = vextract.low.u32 %v168
        %v170 = vextract.high.u32 %v168
        %v171 = vshrl.u32 %v170, 1
        %v172 = vmul.u32 %v171, 3
        %v173 = vsub.s32 %v167, %v172
        %v174 = vsub.s32 0, %v173
        %v175 = vsel %vm165, %v174, %v173
        %vm176 = vcmp.ne.s32.totalorder %v175, 0
        %vm177 = vcmp.lt.s32.totalorder %v175, 0
        %vm178 = vmand %vm177, %vm176
        %v179 = vadd.s32 %v175, 3
        %v180 = vsel %vm178, %v179, %v175
        %s181 = sld [smem:[#allocation3]]
        %v182 = vstv %s181
        %s183 = sld [smem:[#allocation4]]
        %v184 = vstv %s183
        %vm185 = vcmp.eq.s32.totalorder %v180, 1
        %s186 = sld [smem:[#allocation3 + $0x1]]
        %v187 = vstv %s186
        %v188 = vsel %vm185, %v187, %v182
        %s189 = sld [smem:[#allocation4 + $0x1]]
        %v190 = vstv %s189
        %v191 = vsel %vm185, %v190, %v184
        %vm192 = vcmp.eq.s32.totalorder %v180, 2
        %s193 = sld [smem:[#allocation3 + $0x2]]
        %v194 = vstv %s193
        %v195 = vsel %vm192, %v194, %v188
        %s196 = sld [smem:[#allocation4 + $0x2]]
        %v197 = vstv %s196
        %v198 = vsel %vm192, %v197, %v191
        %v199 = vld [vmem:[%s141] sm:$0xff]
        %v200 = vmul.f32 %v199, %v195
        %v201 = vadd.f32 %v200, %v198
        %202 = vst [vmem:[%s159] sm:$0xff] %v201
        %s203 = sand.u32 %s78, 1
        %s204 = scalar_lea.sflag [#allocation7], %s203
        %s205 = sand.u32 %s78, 1
        %s206 = smul.addr %s205, 8
        %s207 = scalar_lea.vmem [#allocation8], %s206
        // Predicated region
        $region29: #{tpu_custom_call.1} parent=23 // pred_check
          %p208 = pneg %p88
        $region30: #{tpu_custom_call.1} parent=23 // pred_check_branch
          %210 = sbr.rel (%p208) target = $region32
        $region31: #{tpu_custom_call.1} parent=23 // pred_region
          %s212 = ssub.s32 128, 128
          %213 = vsyncadd %s204, %s212
          %s214 = smul.addr %s32, 2
          %s215 = sadd.s32 %s33, %s214
          %s216 = smul.addr %s215, 128
          %s217 = scalar_lea.hbm %s3, %s216
          %s219 = sshll.u32 %s207, 4
          %s220 = int_to_ptr.vmem [resolvable:$true] %s219
          %222 = dma.vmem_to_hbm [thread:$0]  %s220, 128, %s217, %s204
        $region32: #{tpu_custom_call.1} parent=23 // pred_fallthru
          _
      $region24: #{tpu_custom_call.1} parent=5 // pred_fallthru
        _
      %p223 = scmp.le.s32.totalorder 2, %s23
      // Predicated region
      $region33: #{tpu_custom_call.1} parent=5 // pred_check
        %p224 = pneg %p223
      $region34: #{tpu_custom_call.1} parent=5 // pred_check_branch
        %226 = sbr.rel (%p224) target = $region36
      $region35: #{tpu_custom_call.1} parent=5 // pred_region
        %s227 = ssub.s32 %s23, 2
        // Predicated region
        $region37: #{tpu_custom_call.1} parent=35 // pred_check
          %p228 = pneg %p94
        $region38: #{tpu_custom_call.1} parent=35 // pred_check_branch
          %230 = sbr.rel (%p228) target = $region40
        $region39: #{tpu_custom_call.1} parent=35 // pred_region
          %s231 = sand.u32 %s79, 1
          %s232 = scalar_lea.sflag [#allocation7], %s231
          %s233 = sand.u32 %s79, 1
          %s234 = smul.addr %s233, 8
          %s235 = scalar_lea.vmem [#allocation8], %s234
          %236 = dma.done %s232, 128
        $region40: #{tpu_custom_call.1} parent=35 // pred_fallthru
          _
      $region36: #{tpu_custom_call.1} parent=5 // pred_fallthru
        _
    $region6: #{tpu_custom_call.1} parent=1 // loop_footer
      %s27 = sadd.s32 1, %s23
    $region7: #{tpu_custom_call.1} parent=1 // loop_footer_branch
      %22 = sbr.rel target = $region3
    $region8: #{tpu_custom_call.1} parent=1 // loop_exit
      _
    %237 = vsyncpa [#allocation6], 1
    %s238 = scalar_lea.sflag [#allocation6], 1
    %239 = vsyncpa %s238, 1
    %240 = vsyncpa [#allocation7], 1
    %s241 = scalar_lea.sflag [#allocation7], 1
    %242 = vsyncpa %s241, 1

</llo_original>
